<compile_context>
chip_gen: v5e
topology: v5e:2x2
jax: 0.10.0
libtpu: 0.0.40
codegen_flags: <defaults>
</compile_context>

<pallas_src>
import functools
import math

import jax
import jax.numpy as jnp
from jax.experimental import pallas as pl
from jax.experimental.pallas import tpu as pltpu


# ----------------------------------------------------------------------------
# Pallas kernel: attention MLP -> gating -> L2 normalize -> fused prototype
# similarities (f32) -> max over prototypes -> (temperature-folded) projection
# ----------------------------------------------------------------------------
def _adapter_kernel(
    feats_ref,      # (TM, D)          f32  input feature tile
    w1_ref,         # (D, D)           bf16 feature_attention Linear #1 (in,out)
    w2_ref,         # (D, D)           bf16 feature_attention Linear #2 (in,out)
    protos_ref,     # (D, P*V_pad)     f32  fused, lane-padded prototypes
    wo_ref,         # (V_pad, V_pad)   bf16 temperature * output_projection
    consts_ref,     # (8, Lc)          f32  packed [b1, gamma, beta, b2, bo]
    out_ref,        # (TM, V_pad)      bf16 lane-dense output tile
    *,
    num_prototypes,
):
    d = feats_ref.shape[1]
    v_pad = out_ref.shape[1]

    # unpack the small constant vectors (single DMA'd operand)
    c = consts_ref[...]
    b1 = c[0:1, :d]
    gamma = c[1:2, :d]
    beta = c[2:3, :d]
    b2 = c[3:4, :d]
    bo = c[4:5, :v_pad]

    x = feats_ref[...]                                         # (TM, D) f32
    x_bf = x.astype(jnp.bfloat16)

    # --- feature_attention MLP ------------------------------------------------
    h = jnp.dot(x_bf, w1_ref[...], preferred_element_type=jnp.float32) + b1

    # LayerNorm (eps = 1e-5, nn.LayerNorm default)
    mu = jnp.mean(h, axis=-1, keepdims=True)
    var = jnp.mean((h - mu) * (h - mu), axis=-1, keepdims=True)
    h_norm = (h - mu) * jax.lax.rsqrt(var + 1e-5)
    h_norm = h_norm * gamma + beta

    # tanh GELU (EUP) instead of erf polynomial (VPU)
    g = jax.nn.gelu(h_norm, approximate=True)

    a = jnp.dot(g.astype(jnp.bfloat16), w2_ref[...],
                preferred_element_type=jnp.float32) + b2
    attn = jax.nn.sigmoid(a)                                   # (TM, D)

    # --- gating + L2 normalize (F.normalize, p=2, dim=-1) ----------------------
    w = x * attn
    sumsq = jnp.sum(w * w, axis=-1, keepdims=True)
    # eps clamp moved to the squared norm (1e-24 ~ (1e-12)^2); rsqrt -> EUP.
    nf = w * jax.lax.rsqrt(jnp.maximum(sumsq, 1e-24))          # (TM, D) f32

    # --- fused prototype similarities + max over prototypes --------------------
    # one (TM, D) x (D, P*V_pad) matmul, kept in f32 for accuracy (cheap at D=32)
    sim = jnp.dot(nf, protos_ref[...],
                  preferred_element_type=jnp.float32)          # (TM, P*V_pad)
    max_sim = sim[:, 0:v_pad]
    for p in range(1, num_prototypes):                         # 128-aligned slices
        max_sim = jnp.maximum(max_sim, sim[:, p * v_pad:(p + 1) * v_pad])

    # --- output projection (temperature already folded into wo_ref) ------------
    logits = jnp.dot(max_sim.astype(jnp.bfloat16), wo_ref[...],
                     preferred_element_type=jnp.float32) + bo

    out_ref[...] = logits.astype(out_ref.dtype)                # (TM, V_pad) bf16


# ----------------------------------------------------------------------------
# Wrapper
# ----------------------------------------------------------------------------
def few_shot_diacritic_adapter(features, kparams, *, tile_m=2048):
    """features: [B, S, D] float32 -> logits [B, S, V] float32."""
    B, S, D = features.shape
    M = B * S
    V = kparams["vocab_size"]
    P = kparams["num_prototypes"]
    v_pad = kparams["v_pad"]
    lc = kparams["lc"]

    def rup(a, b):
        return ((a + b - 1) // b) * b

    def cdiv(a, b):
        return -(-a // b)

    # Row tiling. ALIGN=16 keeps the bf16 output tile sublane-aligned (and
    # trivially satisfies the f32 (8, _) rule).
    ALIGN = 16
    M_a = rup(M, ALIGN)
    tile_m = rup(max(int(tile_m), ALIGN), ALIGN)
    n_steps = cdiv(M_a, tile_m)
    # v7x: keep the grid >= 2 steps when there are enough rows so both
    # TensorCores get work (and DMA/compute pipeline across steps).
    if n_steps < 2 and M_a >= 2 * ALIGN:
        n_steps = 2
    tm = rup(cdiv(M_a, n_steps), ALIGN)
    m_pad = cdiv(M, tm) * tm

    flat = features.reshape(M, D).astype(jnp.float32)
    if m_pad != M:
        # Only hit for ragged M that 16-alignment cannot absorb (adds < tm
        # zero rows); the common demo shapes take the pad-free path.
        flat = jnp.pad(flat, ((0, m_pad - M), (0, 0)))

    grid = (m_pad // tm,)

    def const(shape):
        return pl.BlockSpec(shape, lambda i: (0,) * len(shape))

    # VMEM budget: double-buffered IO tiles + rough per-row intermediates +
    # resident constants; clamp to [32 MiB default, 48 MiB v7x-safe cap].
    per_row = (2 * D * 4                       # feature tile (f32, x2 buffers)
               + 2 * v_pad * 2                 # output tile (bf16, x2 buffers)
               + (10 * D + (P + 3) * v_pad) * 4)  # in-kernel f32 intermediates
    const_bytes = (2 * D * D * 2               # w1, w2 bf16
                   + D * P * v_pad * 4         # prototypes f32
                   + v_pad * v_pad * 2         # wo bf16
                   + 8 * lc * 4)               # packed consts f32
    vmem_est = tm * per_row + 4 * const_bytes + (2 << 20)
    vmem_limit = int(min(48 * 1024 * 1024, max(32 * 1024 * 1024, vmem_est)))

    flops = int(2 * m_pad * (2 * D * D + D * P * v_pad + v_pad * v_pad))
    bytes_accessed = int(
        m_pad * D * 4 + m_pad * v_pad * 2      # feature read / bf16 logit write
        + 2 * D * D * 2 + v_pad * v_pad * 2    # bf16 weights
        + D * P * v_pad * 4 + 8 * lc * 4)      # f32 prototypes + packed consts
    transcendentals = int(m_pad * (2 * D + 4))

    kernel = functools.partial(_adapter_kernel, num_prototypes=P)

    out = pl.pallas_call(
        kernel,
        out_shape=jax.ShapeDtypeStruct((m_pad, v_pad), jnp.bfloat16),
        grid_spec=pltpu.PrefetchScalarGridSpec(
            num_scalar_prefetch=0,
            grid=grid,
            in_specs=[
                pl.BlockSpec((tm, D), lambda i: (i, 0)),        # features tile
                const((D, D)),                                  # w1 (bf16)
                const((D, D)),                                  # w2 (bf16)
                const((D, P * v_pad)),                          # fused prototypes (f32)
                const((v_pad, v_pad)),                          # temperature * wo (bf16)
                const((8, lc)),                                 # packed b1/gamma/beta/b2/bo
            ],
            out_specs=pl.BlockSpec((tm, v_pad), lambda i: (i, 0)),
        ),
        compiler_params=pltpu.CompilerParams(
            dimension_semantics=("parallel",),
            vmem_limit_bytes=vmem_limit,
        ),
        cost_estimate=pl.CostEstimate(
            flops=flops,
            transcendentals=transcendentals,
            bytes_accessed=bytes_accessed,
        ),
    )(
        flat,
        kparams["w1"], kparams["w2"],
        kparams["protos_flat"],
        kparams["wo_scaled"],
        kparams["consts"],
    )
    return out[:M, :V].astype(jnp.float32).reshape(B, S, V)


# ----------------------------------------------------------------------------
# Deterministic parameter init (mirrors the PyTorch __init__ / _init_weights)
# ----------------------------------------------------------------------------
def init_params(key, feature_dim, diacritic_vocab_size, num_prototypes=5):
    D, V = feature_dim, diacritic_vocab_size
    keys = jax.random.split(key, 4)

    def xavier_uniform(k, fan_in, fan_out):
        limit = math.sqrt(6.0 / (fan_in + fan_out))
        # stored as (in, out) so the kernel / reference can use x @ W directly
        return jax.random.uniform(k, (fan_in, fan_out), jnp.float32, -limit, limit)

    protos = jax.random.normal(keys[0], (V, num_prototypes, D), jnp.float32)
    protos = protos / jnp.maximum(
        jnp.linalg.norm(protos, axis=-1, keepdims=True), 1e-12)

    return dict(
        protos=protos,                                   # (V, P, D)
        temperature=jnp.asarray(10.0, jnp.float32),
        w1=xavier_uniform(keys[1], D, D),
        b1=jnp.zeros((D,), jnp.float32),
        gamma=jnp.ones((D,), jnp.float32),
        beta=jnp.zeros((D,), jnp.float32),
        w2=xavier_uniform(keys[2], D, D),
        b2=jnp.zeros((D,), jnp.float32),
        wo=xavier_uniform(keys[3], V, V),
        bo=jnp.zeros((V,), jnp.float32),
    )


# ----------------------------------------------------------------------------
# One-time kernel parameter prep: bf16 MLP weights, f32 fused + lane-padded
# prototypes, temperature folded into the (padded) output projection, and the
# five small f32 vectors packed into one operand.
# ----------------------------------------------------------------------------
def prepare_kernel_params(params, *, lane=128):
    D = params["w1"].shape[0]
    V = params["wo"].shape[0]
    P = params["protos"].shape[1]
    v_pad = ((V + lane - 1) // lane) * lane
    lc = ((max(D, v_pad) + lane - 1) // lane) * lane

    # prototypes (V, P, D) -> (D, P * v_pad); column block p holds prototype p
    # of every class v (classes V..v_pad-1 zero-padded -> sim = 0 there).
    pt = jnp.transpose(params["protos"], (1, 2, 0))            # (P, D, V)
    pt = jnp.pad(pt, ((0, 0), (0, 0), (0, v_pad - V)))         # (P, D, v_pad)
    protos_flat = jnp.transpose(pt, (1, 0, 2)).reshape(D, P * v_pad)

    wo_scaled = jnp.zeros((v_pad, v_pad), jnp.float32)
    wo_scaled = wo_scaled.at[:V, :V].set(params["temperature"] * params["wo"])

    # pack b1 / gamma / beta / b2 / bo into one (8, Lc) f32 slab (rows 5-7 pad)
    consts = jnp.zeros((8, lc), jnp.float32)
    consts = consts.at[0, :D].set(params["b1"])
    consts = consts.at[1, :D].set(params["gamma"])
    consts = consts.at[2, :D].set(params["beta"])
    consts = consts.at[3, :D].set(params["b2"])
    consts = consts.at[4, :V].set(params["bo"])

    return dict(
        vocab_size=V, num_prototypes=P, v_pad=v_pad, lc=lc,
        w1=params["w1"].astype(jnp.bfloat16),
        w2=params["w2"].astype(jnp.bfloat16),
        protos_flat=protos_flat.astype(jnp.float32),           # keep f32 (accuracy)
        wo_scaled=wo_scaled.astype(jnp.bfloat16),
        consts=consts,
    )


# ----------------------------------------------------------------------------
# Pure-JAX f32 reference (PyTorch-faithful: erf GELU, f32, sqrt-normalize)
# ----------------------------------------------------------------------------
def reference_forward(features, params):
    B, S, D = features.shape
    V, P, _ = params["protos"].shape

    h = features @ params["w1"] + params["b1"]
    mu = jnp.mean(h, axis=-1, keepdims=True)
    var = jnp.mean((h - mu) ** 2, axis=-1, keepdims=True)
    hn = (h - mu) / jnp.sqrt(var + 1e-5) * params["gamma"] + params["beta"]
    g = jax.nn.gelu(hn, approximate=False)
    attn = jax.nn.sigmoid(g @ params["w2"] + params["b2"])

    w = features * attn
    nf = w / jnp.maximum(jnp.linalg.norm(w, axis=-1, keepdims=True), 1e-12)

    flat_protos = params["protos"].reshape(V * P, D)
    sims = (nf.reshape(-1, D) @ flat_protos.T).reshape(B, S, V, P)
    max_sim = jnp.max(sims, axis=-1)
    return (max_sim * params["temperature"]) @ params["wo"] + params["bo"]


def _check(out, ref, name):
    out = jnp.asarray(out, jnp.float32)
    ref = jnp.asarray(ref, jnp.float32)
    max_err = float(jnp.max(jnp.abs(out - ref)))
    rel_err = float(jnp.linalg.norm(out - ref) /
                    jnp.maximum(jnp.linalg.norm(ref), 1e-6))
    # bf16 MLP weights + tanh-GELU + rsqrt normalize + bf16 output store vs the
    # f32/erf reference (the similarity dot itself is kept f32) -> tolerance.
    assert rel_err < 4e-2 and max_err < 0.3, (
        f"{name}: rel_err={rel_err:.4g} max_abs_err={max_err:.4g}")


if __name__ == "__main__":
    D, V, P = 32, 16, 5                 # feature_dim, vocab, num_prototypes

    key = jax.random.PRNGKey(0)
    pkey, xkey, xkey2 = jax.random.split(key, 3)

    params = init_params(pkey, D, V, P)
    kparams = prepare_kernel_params(params)

    # Small-shape run (matches the module's typical unit shapes): B=2, S=8.
    B, S = 2, 8
    feats = jax.random.normal(xkey, (B, S, D), jnp.float32)
    out = jax.block_until_ready(few_shot_diacritic_adapter(feats, kparams))
    assert out.shape == (B, S, V)
    _check(out, reference_forward(feats, params), "small")

    # Larger run exercising the multi-step parallel grid (tm=1024, grid=(2,)).
    B2, S2 = 8, 256
    feats2 = jax.random.normal(xkey2, (B2, S2, D), jnp.float32)
    out2 = jax.block_until_ready(
        few_shot_diacritic_adapter(feats2, kparams, tile_m=2048))
    assert out2.shape == (B2, S2, V)
    _check(out2, reference_forward(feats2, params), "tiled")

    print("KERNEL_OK")
</pallas_src>

<mosaic_0001>
module attributes {stable_mosaic.version = 11 : i64} {
  func.func @_adapter_kernel(%arg0: i32, %arg1: memref<16x32xf32, #tpu.memory_space<vmem>>, %arg2: memref<32x32xbf16, #tpu.memory_space<vmem>>, %arg3: memref<32x32xbf16, #tpu.memory_space<vmem>>, %arg4: memref<32x640xf32, #tpu.memory_space<vmem>>, %arg5: memref<128x128xbf16, #tpu.memory_space<vmem>>, %arg6: memref<8x128xf32, #tpu.memory_space<vmem>>, %arg7: memref<16x128xbf16, #tpu.memory_space<vmem>>) attributes {dimension_semantics = [#tpu.dimension_semantics<parallel>], iteration_bounds = array<i64: 1>, scalar_prefetch = 0 : i64, scratch_operands = 0 : i64, tpu.core_type = #tpu.core_type<tc>, window_params = [{transform_indices = @transform_0, window_bounds = array<i64: 16, 32>}, {pipeline_mode = #tpu.pipeline_mode<synchronous>, transform_indices = @transform_1, window_bounds = array<i64: 32, 32>}, {pipeline_mode = #tpu.pipeline_mode<synchronous>, transform_indices = @transform_2, window_bounds = array<i64: 32, 32>}, {pipeline_mode = #tpu.pipeline_mode<synchronous>, transform_indices = @transform_3, window_bounds = array<i64: 32, 640>}, {pipeline_mode = #tpu.pipeline_mode<synchronous>, transform_indices = @transform_4, window_bounds = array<i64: 128, 128>}, {pipeline_mode = #tpu.pipeline_mode<synchronous>, transform_indices = @transform_5, window_bounds = array<i64: 8, 128>}, {transform_indices = @transform_6, window_bounds = array<i64: 16, 128>}]} {
    %c0 = arith.constant 0 : index
    %c0_0 = arith.constant 0 : index
    %0 = vector.load %arg6[%c0, %c0_0] : memref<8x128xf32, #tpu.memory_space<vmem>>, vector<8x128xf32>
    %1 = vector.extract_strided_slice %0 {offsets = [0, 0], sizes = [1, 32], strides = [1, 1]} : vector<8x128xf32> to vector<1x32xf32>
    %2 = vector.extract_strided_slice %0 {offsets = [1, 0], sizes = [1, 32], strides = [1, 1]} : vector<8x128xf32> to vector<1x32xf32>
    %3 = vector.extract_strided_slice %0 {offsets = [2, 0], sizes = [1, 32], strides = [1, 1]} : vector<8x128xf32> to vector<1x32xf32>
    %4 = vector.extract_strided_slice %0 {offsets = [3, 0], sizes = [1, 32], strides = [1, 1]} : vector<8x128xf32> to vector<1x32xf32>
    %5 = vector.extract_strided_slice %0 {offsets = [4, 0], sizes = [1, 128], strides = [1, 1]} : vector<8x128xf32> to vector<1x128xf32>
    %c0_1 = arith.constant 0 : index
    %c0_2 = arith.constant 0 : index
    %6 = vector.load %arg1[%c0_1, %c0_2] : memref<16x32xf32, #tpu.memory_space<vmem>>, vector<16x32xf32>
    %7 = arith.truncf %6 : vector<16x32xf32> to vector<16x32xbf16>
    %c0_3 = arith.constant 0 : index
    %c0_4 = arith.constant 0 : index
    %8 = vector.load %arg2[%c0_3, %c0_4] : memref<32x32xbf16, #tpu.memory_space<vmem>>, vector<32x32xbf16>
    %cst = arith.constant dense<0.000000e+00> : vector<16x32xf32>
    %9 = tpu.matmul %7, %8, %cst {dimension_numbers = #tpu.dot_dimension_numbers<[1], [0], [0], [1], [0, 0, 1, 1], [], []>} : vector<16x32xbf16>, vector<32x32xbf16>, vector<16x32xf32> -> vector<16x32xf32>
    %10 = vector.broadcast %1 : vector<1x32xf32> to vector<16x32xf32>
    %11 = arith.addf %9, %10 : vector<16x32xf32>
    %cst_5 = arith.constant dense<0.000000e+00> : vector<16xf32>
    %12 = vector.multi_reduction <add>, %11, %cst_5 [1] : vector<16x32xf32> to vector<16xf32>
    %13 = vector.shape_cast %12 : vector<16xf32> to vector<16x1xf32>
    %cst_6 = arith.constant 3.200000e+01 : f32
    %14 = vector.broadcast %cst_6 : f32 to vector<16x1xf32>
    %15 = arith.divf %13, %14 : vector<16x1xf32>
    %16 = vector.broadcast %15 : vector<16x1xf32> to vector<16x32xf32>
    %17 = arith.subf %11, %16 : vector<16x32xf32>
    %18 = vector.broadcast %15 : vector<16x1xf32> to vector<16x32xf32>
    %19 = arith.subf %11, %18 : vector<16x32xf32>
    %20 = arith.mulf %17, %19 : vector<16x32xf32>
    %cst_7 = arith.constant dense<0.000000e+00> : vector<16xf32>
    %21 = vector.multi_reduction <add>, %20, %cst_7 [1] : vector<16x32xf32> to vector<16xf32>
    %22 = vector.shape_cast %21 : vector<16xf32> to vector<16x1xf32>
    %cst_8 = arith.constant 3.200000e+01 : f32
    %23 = vector.broadcast %cst_8 : f32 to vector<16x1xf32>
    %24 = arith.divf %22, %23 : vector<16x1xf32>
    %25 = vector.broadcast %15 : vector<16x1xf32> to vector<16x32xf32>
    %26 = arith.subf %11, %25 : vector<16x32xf32>
    %cst_9 = arith.constant 9.99999974E-6 : f32
    %27 = vector.broadcast %cst_9 : f32 to vector<16x1xf32>
    %28 = arith.addf %24, %27 : vector<16x1xf32>
    %29 = math.rsqrt %28 : vector<16x1xf32>
    %30 = vector.broadcast %29 : vector<16x1xf32> to vector<16x32xf32>
    %31 = arith.mulf %26, %30 : vector<16x32xf32>
    %32 = vector.broadcast %2 : vector<1x32xf32> to vector<16x32xf32>
    %33 = arith.mulf %31, %32 : vector<16x32xf32>
    %34 = vector.broadcast %3 : vector<1x32xf32> to vector<16x32xf32>
    %35 = arith.addf %33, %34 : vector<16x32xf32>
    %36 = arith.mulf %35, %35 : vector<16x32xf32>
    %37 = arith.mulf %35, %36 : vector<16x32xf32>
    %cst_10 = arith.constant 4.471500e-02 : f32
    %38 = vector.broadcast %cst_10 : f32 to vector<16x32xf32>
    %39 = arith.mulf %38, %37 : vector<16x32xf32>
    %40 = arith.addf %35, %39 : vector<16x32xf32>
    %cst_11 = arith.constant 0.797884583 : f32
    %41 = vector.broadcast %cst_11 : f32 to vector<16x32xf32>
    %42 = arith.mulf %41, %40 : vector<16x32xf32>
    %43 = math.tanh %42 : vector<16x32xf32>
    %cst_12 = arith.constant 1.000000e+00 : f32
    %44 = vector.broadcast %cst_12 : f32 to vector<16x32xf32>
    %45 = arith.addf %44, %43 : vector<16x32xf32>
    %cst_13 = arith.constant 5.000000e-01 : f32
    %46 = vector.broadcast %cst_13 : f32 to vector<16x32xf32>
    %47 = arith.mulf %46, %45 : vector<16x32xf32>
    %48 = arith.mulf %35, %47 : vector<16x32xf32>
    %49 = arith.truncf %48 : vector<16x32xf32> to vector<16x32xbf16>
    %c0_14 = arith.constant 0 : index
    %c0_15 = arith.constant 0 : index
    %50 = vector.load %arg3[%c0_14, %c0_15] : memref<32x32xbf16, #tpu.memory_space<vmem>>, vector<32x32xbf16>
    %cst_16 = arith.constant dense<0.000000e+00> : vector<16x32xf32>
    %51 = tpu.matmul %49, %50, %cst_16 {dimension_numbers = #tpu.dot_dimension_numbers<[1], [0], [0], [1], [0, 0, 1, 1], [], []>} : vector<16x32xbf16>, vector<32x32xbf16>, vector<16x32xf32> -> vector<16x32xf32>
    %52 = vector.broadcast %4 : vector<1x32xf32> to vector<16x32xf32>
    %53 = arith.addf %51, %52 : vector<16x32xf32>
    %54 = arith.negf %53 : vector<16x32xf32>
    %55 = math.exp %54 : vector<16x32xf32>
    %cst_17 = arith.constant 1.000000e+00 : f32
    %56 = vector.broadcast %cst_17 : f32 to vector<16x32xf32>
    %57 = arith.addf %56, %55 : vector<16x32xf32>
    %58 = arith.divf %56, %57 : vector<16x32xf32>
    %59 = arith.mulf %6, %58 : vector<16x32xf32>
    %60 = arith.mulf %59, %59 : vector<16x32xf32>
    %cst_18 = arith.constant dense<0.000000e+00> : vector<16xf32>
    %61 = vector.multi_reduction <add>, %60, %cst_18 [1] : vector<16x32xf32> to vector<16xf32>
    %62 = vector.shape_cast %61 : vector<16xf32> to vector<16x1xf32>
    %cst_19 = arith.constant 1.000000e-24 : f32
    %63 = vector.broadcast %cst_19 : f32 to vector<16x1xf32>
    %64 = arith.maximumf %62, %63 : vector<16x1xf32>
    %65 = math.rsqrt %64 : vector<16x1xf32>
    %66 = vector.broadcast %65 : vector<16x1xf32> to vector<16x32xf32>
    %67 = arith.mulf %59, %66 : vector<16x32xf32>
    %c0_20 = arith.constant 0 : index
    %c0_21 = arith.constant 0 : index
    %68 = vector.load %arg4[%c0_20, %c0_21] : memref<32x640xf32, #tpu.memory_space<vmem>>, vector<32x640xf32>
    %cst_22 = arith.constant dense<0.000000e+00> : vector<16x640xf32>
    %69 = tpu.matmul %67, %68, %cst_22 {dimension_numbers = #tpu.dot_dimension_numbers<[1], [0], [0], [1], [0, 0, 1, 1], [], []>} : vector<16x32xf32>, vector<32x640xf32>, vector<16x640xf32> -> vector<16x640xf32>
    %70 = vector.extract_strided_slice %69 {offsets = [0, 0], sizes = [16, 128], strides = [1, 1]} : vector<16x640xf32> to vector<16x128xf32>
    %71 = vector.extract_strided_slice %69 {offsets = [0, 128], sizes = [16, 128], strides = [1, 1]} : vector<16x640xf32> to vector<16x128xf32>
    %72 = arith.maximumf %70, %71 : vector<16x128xf32>
    %73 = vector.extract_strided_slice %69 {offsets = [0, 256], sizes = [16, 128], strides = [1, 1]} : vector<16x640xf32> to vector<16x128xf32>
    %74 = arith.maximumf %72, %73 : vector<16x128xf32>
    %75 = vector.extract_strided_slice %69 {offsets = [0, 384], sizes = [16, 128], strides = [1, 1]} : vector<16x640xf32> to vector<16x128xf32>
    %76 = arith.maximumf %74, %75 : vector<16x128xf32>
    %77 = vector.extract_strided_slice %69 {offsets = [0, 512], sizes = [16, 128], strides = [1, 1]} : vector<16x640xf32> to vector<16x128xf32>
    %78 = arith.maximumf %76, %77 : vector<16x128xf32>
    %79 = arith.truncf %78 : vector<16x128xf32> to vector<16x128xbf16>
    %c0_23 = arith.constant 0 : index
    %c0_24 = arith.constant 0 : index
    %80 = vector.load %arg5[%c0_23, %c0_24] : memref<128x128xbf16, #tpu.memory_space<vmem>>, vector<128x128xbf16>
    %cst_25 = arith.constant dense<0.000000e+00> : vector<16x128xf32>
    %81 = tpu.matmul %79, %80, %cst_25 {dimension_numbers = #tpu.dot_dimension_numbers<[1], [0], [0], [1], [0, 0, 1, 1], [], []>} : vector<16x128xbf16>, vector<128x128xbf16>, vector<16x128xf32> -> vector<16x128xf32>
    %82 = vector.broadcast %5 : vector<1x128xf32> to vector<16x128xf32>
    %83 = arith.addf %81, %82 : vector<16x128xf32>
    %84 = arith.truncf %83 : vector<16x128xf32> to vector<16x128xbf16>
    %c0_26 = arith.constant 0 : index
    %c0_27 = arith.constant 0 : index
    %85 = vector.load %arg7[%c0_26, %c0_27] : memref<16x128xbf16, #tpu.memory_space<vmem>>, vector<16x128xbf16>
    tpu.vector_store %arg7[%c0_26, %c0_27], %84 {strides = array<i32>} : memref<16x128xbf16, #tpu.memory_space<vmem>>, vector<16x128xbf16>,
    return
  }
  func.func @transform_0(%arg0: i32) -> (i32, i32) {
    %c0_i32 = arith.constant 0 : i32
    %c0_i32_0 = arith.constant 0 : i32
    return %arg0, %c0_i32 : i32, i32
  }
  func.func @transform_1(%arg0: i32) -> (i32, i32) {
    %c0_i32 = arith.constant 0 : i32
    %c0_i32_0 = arith.constant 0 : i32
    %c0_i32_1 = arith.constant 0 : i32
    return %c0_i32, %c0_i32_0 : i32, i32
  }
  func.func @transform_2(%arg0: i32) -> (i32, i32) {
    %c0_i32 = arith.constant 0 : i32
    %c0_i32_0 = arith.constant 0 : i32
    %c0_i32_1 = arith.constant 0 : i32
    return %c0_i32, %c0_i32_0 : i32, i32
  }
  func.func @transform_3(%arg0: i32) -> (i32, i32) {
    %c0_i32 = arith.constant 0 : i32
    %c0_i32_0 = arith.constant 0 : i32
    %c0_i32_1 = arith.constant 0 : i32
    return %c0_i32, %c0_i32_0 : i32, i32
  }
  func.func @transform_4(%arg0: i32) -> (i32, i32) {
    %c0_i32 = arith.constant 0 : i32
    %c0_i32_0 = arith.constant 0 : i32
    %c0_i32_1 = arith.constant 0 : i32
    return %c0_i32, %c0_i32_0 : i32, i32
  }
  func.func @transform_5(%arg0: i32) -> (i32, i32) {
    %c0_i32 = arith.constant 0 : i32
    %c0_i32_0 = arith.constant 0 : i32
    %c0_i32_1 = arith.constant 0 : i32
    return %c0_i32, %c0_i32_0 : i32, i32
  }
  func.func @transform_6(%arg0: i32) -> (i32, i32) {
    %c0_i32 = arith.constant 0 : i32
    %c0_i32_0 = arith.constant 0 : i32
    return %arg0, %c0_i32 : i32, i32
  }
}

</mosaic_0001>

<llo_original>
// kernel: tpu_custom_call.1
$region0: #{tpu_custom_call.1}
  #allocation0 [shape = 'u32[]', space=smem, size = 0x4, offset = 0x4, fixed_abs, tag = 'smem constant byte address 0x4 - core index']
  #allocation1 [shape = 'u32[72,128]{1,0:T(1,128)}', space=vmem, size = 0x9000, scoped, tag = 'internal scratch']
  %s0 = inlined_call_operand.hbm [shape: f32[16,32], index: 0, kind: input, shape index: {}]
  %s1 = inlined_call_operand.hbm [shape: bf16[32,32], index: 1, kind: input, shape index: {}]
  %s2 = inlined_call_operand.hbm [shape: bf16[32,32], index: 2, kind: input, shape index: {}]
  %s3 = inlined_call_operand.hbm [shape: f32[32,640], index: 3, kind: input, shape index: {}]
  %s4 = inlined_call_operand.hbm [shape: bf16[128,128], index: 4, kind: input, shape index: {}]
  %s5 = inlined_call_operand.hbm [shape: f32[8,128], index: 5, kind: input, shape index: {}]
  %s6 = inlined_call_operand.hbm [shape: bf16[16,128], index: 6, kind: output, shape index: {}]
  %s7 = sld [smem:[#allocation0]]
  $region58: #{tpu_custom_call.1} parent=0
    _
  %s9 = ssub.s32 1, %s7
  %s10 = scalar_select 0, %s9, %s7
  $region1: #{tpu_custom_call.1} parent=0
    #allocation2 [shape = 'u8[8192]{0}', space=vmem, size = 0x2000, scoped, tag = 'input window, operand 0, single buffered']
    #allocation3 [shape = 's32[1]{0}', space=sflag, size = 0x4, scoped, tag = 'scoped memory for tpu_custom_call.1']
    #allocation4 [shape = 's32[1]{0}', space=sflag, size = 0x4, scoped, tag = 'scoped memory for tpu_custom_call.1']
    #allocation5 [shape = 'u8[8192]{0}', space=vmem, size = 0x2000, scoped, tag = 'input window, operand 1, single buffered']
    #allocation6 [shape = 's32[1]{0}', space=sflag, size = 0x4, scoped, tag = 'scoped memory for tpu_custom_call.1']
    #allocation7 [shape = 'u8[8192]{0}', space=vmem, size = 0x2000, scoped, tag = 'input window, operand 2, single buffered']
    #allocation8 [shape = 'u8[81920]{0}', space=vmem, size = 0x14000, scoped, tag = 'input window, operand 3, single buffered']
    #allocation9 [shape = 's32[1]{0}', space=sflag, size = 0x4, scoped, tag = 'scoped memory for tpu_custom_call.1']
    #allocation10 [shape = 'u8[32768]{0}', space=vmem, size = 0x8000, scoped, tag = 'input window, operand 4, single buffered']
    #allocation11 [shape = 'u8[4096]{0}', space=vmem, size = 0x1000, scoped, tag = 'input window, operand 5, single buffered']
    #allocation12 [shape = 's32[1]{0}', space=sflag, size = 0x4, scoped, tag = 'scoped memory for tpu_custom_call.1']
    #allocation13 [shape = 'u8[4096]{0}', space=vmem, size = 0x1000, scoped, tag = 'output window, operand 0, single buffered']
    %11 = vsyncpa [#allocation3], 0
    %12 = vsyncpa [#allocation6], 0
    %13 = vsyncpa [#allocation9], 0
    %14 = vsyncpa [#allocation12], 0
    %15 = vsyncpa [#allocation4], 0
    // Predicated region
    $region2: #{tpu_custom_call.1} parent=1 // pred_check
      _
    $region3: #{tpu_custom_call.1} parent=1 // pred_check_branch
      %17 = sbr.rel (0) target = $region5
    $region4: #{tpu_custom_call.1} parent=1 // pred_region
      %19 = vsyncadd [#allocation3], 0
      %s20 = sshll.u32 %s0, 4
      %s21 = int_to_ptr.hbm [resolvable:$true] %s20
      %s22 = sshll.u32 [#allocation2], 4
      %s23 = int_to_ptr.vmem [resolvable:$true] %s22
      %28 = dma.hbm_to_vmem [thread:$0]  %s21, 256, %s23, [#allocation3], 128, 128, 8
    $region5: #{tpu_custom_call.1} parent=1 // pred_fallthru
      _
    // Predicated region
    $region6: #{tpu_custom_call.1} parent=1 // pred_check
      _
    $region7: #{tpu_custom_call.1} parent=1 // pred_check_branch
      %30 = sbr.rel (0) target = $region9
    $region8: #{tpu_custom_call.1} parent=1 // pred_region
      %32 = vsyncadd [#allocation6], 0
      %s33 = sshll.u32 %s1, 4
      %s34 = int_to_ptr.hbm [resolvable:$true] %s33
      %s35 = sshll.u32 [#allocation5], 4
      %s36 = int_to_ptr.vmem [resolvable:$true] %s35
      %41 = dma.hbm_to_vmem [thread:$0]  %s34, 256, %s36, [#allocation6], 64, 64, 4
    $region9: #{tpu_custom_call.1} parent=1 // pred_fallthru
      _
    // Predicated region
    $region10: #{tpu_custom_call.1} parent=1 // pred_check
      _
    $region11: #{tpu_custom_call.1} parent=1 // pred_check_branch
      %43 = sbr.rel (0) target = $region13
    $region12: #{tpu_custom_call.1} parent=1 // pred_region
      %45 = vsyncadd [#allocation6], 0
      %s46 = sshll.u32 %s2, 4
      %s47 = int_to_ptr.hbm [resolvable:$true] %s46
      %s48 = sshll.u32 [#allocation7], 4
      %s49 = int_to_ptr.vmem [resolvable:$true] %s48
      %54 = dma.hbm_to_vmem [thread:$0]  %s47, 256, %s49, [#allocation6], 64, 64, 4
    $region13: #{tpu_custom_call.1} parent=1 // pred_fallthru
      _
    // Predicated region
    $region14: #{tpu_custom_call.1} parent=1 // pred_check
      _
    $region15: #{tpu_custom_call.1} parent=1 // pred_check_branch
      %56 = sbr.rel (0) target = $region17
    $region16: #{tpu_custom_call.1} parent=1 // pred_region
      %58 = vsyncadd [#allocation9], 0
      %s59 = sshll.u32 %s3, 4
      %s60 = int_to_ptr.hbm [resolvable:$true] %s59
      %s61 = sshll.u32 [#allocation8], 4
      %s62 = int_to_ptr.vmem [resolvable:$true] %s61
      %67 = dma.hbm_to_vmem [thread:$0]  %s60, 2560, %s62, [#allocation9], 640, 640, 40
    $region17: #{tpu_custom_call.1} parent=1 // pred_fallthru
      _
    // Predicated region
    $region18: #{tpu_custom_call.1} parent=1 // pred_check
      _
    $region19: #{tpu_custom_call.1} parent=1 // pred_check_branch
      %69 = sbr.rel (0) target = $region21
    $region20: #{tpu_custom_call.1} parent=1 // pred_region
      %71 = vsyncadd [#allocation9], 0
      %s72 = sshll.u32 %s4, 4
      %s73 = int_to_ptr.hbm [resolvable:$true] %s72
      %s74 = sshll.u32 [#allocation10], 4
      %s75 = int_to_ptr.vmem [resolvable:$true] %s74
      %80 = dma.hbm_to_vmem [thread:$0]  %s73, 1024, %s75, [#allocation9], 64, 64, 4
    $region21: #{tpu_custom_call.1} parent=1 // pred_fallthru
      _
    // Predicated region
    $region22: #{tpu_custom_call.1} parent=1 // pred_check
      _
    $region23: #{tpu_custom_call.1} parent=1 // pred_check_branch
      %82 = sbr.rel (0) target = $region25
    $region24: #{tpu_custom_call.1} parent=1 // pred_region
      %84 = vsyncadd [#allocation12], 0
      %s86 = sshll.u32 %s5, 4
      %s87 = int_to_ptr.hbm [resolvable:$true] %s86
      %s88 = sshll.u32 [#allocation11], 4
      %s89 = int_to_ptr.vmem [resolvable:$true] %s88
      %91 = dma.hbm_to_vmem [thread:$0]  %s87, 128, %s89, [#allocation12]
    $region25: #{tpu_custom_call.1} parent=1 // pred_fallthru
      _
    // Predicated region
    $region26: #{tpu_custom_call.1} parent=1 // pred_check
      _
    $region27: #{tpu_custom_call.1} parent=1 // pred_check_branch
      %93 = sbr.rel (0) target = $region29
    $region28: #{tpu_custom_call.1} parent=1 // pred_region
      %95 = dma.done [#allocation3], 256
    $region29: #{tpu_custom_call.1} parent=1 // pred_fallthru
      _
    // Predicated region
    $region30: #{tpu_custom_call.1} parent=1 // pred_check
      _
    $region31: #{tpu_custom_call.1} parent=1 // pred_check_branch
      %97 = sbr.rel (0) target = $region33
    $region32: #{tpu_custom_call.1} parent=1 // pred_region
      %99 = dma.done [#allocation6], 256
    $region33: #{tpu_custom_call.1} parent=1 // pred_fallthru
      _
    // Predicated region
    $region34: #{tpu_custom_call.1} parent=1 // pred_check
      _
    $region35: #{tpu_custom_call.1} parent=1 // pred_check_branch
      %101 = sbr.rel (0) target = $region37
    $region36: #{tpu_custom_call.1} parent=1 // pred_region
      %103 = dma.done [#allocation6], 256
    $region37: #{tpu_custom_call.1} parent=1 // pred_fallthru
      _
    // Predicated region
    $region38: #{tpu_custom_call.1} parent=1 // pred_check
      _
    $region39: #{tpu_custom_call.1} parent=1 // pred_check_branch
      %105 = sbr.rel (0) target = $region41
    $region40: #{tpu_custom_call.1} parent=1 // pred_region
      %107 = dma.done [#allocation9], 2560
    $region41: #{tpu_custom_call.1} parent=1 // pred_fallthru
      _
    // Predicated region
    $region42: #{tpu_custom_call.1} parent=1 // pred_check
      _
    $region43: #{tpu_custom_call.1} parent=1 // pred_check_branch
      %109 = sbr.rel (0) target = $region45
    $region44: #{tpu_custom_call.1} parent=1 // pred_region
      %111 = dma.done [#allocation9], 1024
    $region45: #{tpu_custom_call.1} parent=1 // pred_fallthru
      _
    // Predicated region
    $region46: #{tpu_custom_call.1} parent=1 // pred_check
      _
    $region47: #{tpu_custom_call.1} parent=1 // pred_check_branch
      %113 = sbr.rel (0) target = $region49
    $region48: #{tpu_custom_call.1} parent=1 // pred_region
      %115 = dma.done [#allocation12], 128
    $region49: #{tpu_custom_call.1} parent=1 // pred_fallthru
      _
    %v117 = vld [vmem:[#allocation11] sm:$0xff]
    %v118 = vld [vmem:[#allocation2] sm:$0xff]
    %v119 = vld [vmem:[#allocation2 + $0x8] sm:$0xff]
    %v120 = vpack.c.bf16 %v119, %v118
    %v121 = vld [vmem:[#allocation5] sm:$0xf]
    %v122 = vld [vmem:[#allocation5 + $0x4] sm:$0xf]
    %v123 = vld [vmem:[#allocation5 + $0x8] sm:$0xf]
    %v124 = vld [vmem:[#allocation5 + $0xc] sm:$0xf]
    %v125 = vperm.slane %v117, 0
    %v130 = vunpack.c.l.b16 %v121
    %v131 = vunpack.c.l.b16 %v122
    %v132 = vunpack.c.l.b16 %v123
    %v133 = vunpack.c.l.b16 %v124
    %v134 = vpack.c.b16 %v131, %v130
    %v135 = vpack.c.b16 %v133, %v132
    %vm138 = vcmask 261120
    %v140 = vsel %vm138, %v120, 0
    %142 = vmatpush.bf16.msra.mxu0 0
    %143 = vmatpush.bf16.msra.mxu0 0
    %144 = vmatpush.bf16.msra.mxu0 0
    %145 = vmatpush.bf16.msra.mxu0 0
    %146 = vmatpush.bf16.msra.mxu0 0
    %147 = vmatpush.bf16.msra.mxu0 0
    %148 = vmatpush.bf16.msra.mxu0 %v135
    %149 = vmatpush.bf16.msra.mxu0 %v134
    %150 = vmatmul.bf16.gmra.mxu0 %v140
    %v151 = vpop.f32.mrf.mxu0
    %v152 = vadd.f32 %v125, %v151
    %v153 = vpop.f32.mrf.mxu0
    %v154 = vadd.f32 %v125, %v153
    %155 = vdwg.mxu0
    %v156 = vsel %vm138, %v152, 0.0
    %157 = vadd.xlane.f32.xlu0 %v156
    %v158 = vpop.xlane.xlu0 %157
    %v159 = vsel %vm138, %v154, 0.0
    %160 = vadd.xlane.f32.xlu0 %v159
    %v161 = vpop.xlane.xlu0 %160
    %v162 = vrcp.pop 32.0
    %v163 = vmul.f32 32.0, %v162
    %v164 = vsub.f32 1.0, %v163
    %v165 = vmul.f32 %v162, %v164
    %v166 = vadd.f32 %v162, %v165
    %vm167 = vweird.f32 %v162
    %v168 = vsel %vm167, %v162, %v166
    %v169 = vmul.f32 %v158, %v168
    %v170 = vmul.f32 %v161, %v168
    %v171 = vsub.f32 %v152, %v169
    %v172 = vsub.f32 %v154, %v170
    %v173 = vmul.f32 %v171, %v171
    %v174 = vmul.f32 %v172, %v172
    %v175 = vsel %vm138, %v173, 0.0
    %176 = vadd.xlane.f32.xlu0 %v175
    %v177 = vpop.xlane.xlu0 %176
    %v178 = vsel %vm138, %v174, 0.0
    %179 = vadd.xlane.f32.xlu0 %v178
    %v180 = vpop.xlane.xlu0 %179
    %v181 = vmul.f32 %v177, %v168
    %v182 = vmul.f32 %v180, %v168
    %v183 = vadd.f32 %v181, 1e-05
    %v184 = vadd.f32 %v182, 1e-05
    %v185 = vrsqrt.pop %v183
    %v186 = vmul.f32 %v185, %v183
    %v187 = vmul.f32 %v186, %v185
    %v188 = vmul.f32 0.5, %v187
    %v189 = vsub.f32 1.5, %v188
    %v190 = vmul.f32 %v185, %v189
    %vm191 = vweird.f32 %v183
    %vm192 = vweird.f32 %v185
    %vm193 = vmor %vm191, %vm192
    %v194 = vsel %vm193, %v185, %v190
    %v195 = vrsqrt.pop %v184
    %v196 = vmul.f32 %v195, %v184
    %v197 = vmul.f32 %v196, %v195
    %v198 = vmul.f32 0.5, %v197
    %v199 = vsub.f32 1.5, %v198
    %v200 = vmul.f32 %v195, %v199
    %vm201 = vweird.f32 %v184
    %vm202 = vweird.f32 %v195
    %vm203 = vmor %vm201, %vm202
    %v204 = vsel %vm203, %v195, %v200
    %v205 = vmul.f32 %v171, %v194
    %v206 = vmul.f32 %v172, %v204
    %v207 = vperm.slane %v117, 1
    %v208 = vmul.f32 %v205, %v207
    %v209 = vmul.f32 %v206, %v207
    %v210 = vperm.slane %v117, 2
    %v211 = vadd.f32 %v208, %v210
    %v212 = vadd.f32 %v209, %v210
    %v213 = vmul.f32 %v211, %v211
    %v214 = vmul.f32 %v212, %v212
    %v215 = vmul.f32 %v211, %v213
    %v216 = vmul.f32 %v212, %v214
    %v217 = vmul.f32 %v215, 0.044715
    %v218 = vmul.f32 %v216, 0.044715
    %v219 = vadd.f32 %v211, %v217
    %v220 = vadd.f32 %v212, %v218
    %v221 = vmul.f32 %v219, 0.7978846
    %v222 = vmul.f32 %v220, 0.7978846
    %v223 = vtanh.pop %v221
    %v224 = vtanh.pop %v222
    %v225 = vadd.f32 %v223, 1.0
    %v226 = vadd.f32 %v224, 1.0
    %v227 = vmul.f32 %v225, 0.5
    %v228 = vmul.f32 %v226, 0.5
    %v229 = vmul.f32 %v211, %v227
    %v230 = vmul.f32 %v212, %v228
    %v231 = vpack.c.bf16 %v230, %v229
    %v232 = vld [vmem:[#allocation7] sm:$0xf]
    %v233 = vld [vmem:[#allocation7 + $0x4] sm:$0xf]
    %v234 = vld [vmem:[#allocation7 + $0x8] sm:$0xf]
    %v235 = vld [vmem:[#allocation7 + $0xc] sm:$0xf]
    %v236 = vperm.slane %v117, 3
    %v241 = vunpack.c.l.b16 %v232
    %v242 = vunpack.c.l.b16 %v233
    %v243 = vunpack.c.l.b16 %v234
    %v244 = vunpack.c.l.b16 %v235
    %v245 = vpack.c.b16 %v242, %v241
    %v246 = vpack.c.b16 %v244, %v243
    %v250 = vsel %vm138, %v231, 0
    %252 = vmatpush.bf16.msra.mxu0 0
    %253 = vmatpush.bf16.msra.mxu0 0
    %254 = vmatpush.bf16.msra.mxu0 0
    %255 = vmatpush.bf16.msra.mxu0 0
    %256 = vmatpush.bf16.msra.mxu0 0
    %257 = vmatpush.bf16.msra.mxu0 0
    %258 = vmatpush.bf16.msra.mxu0 %v246
    %259 = vmatpush.bf16.msra.mxu0 %v245
    %260 = vmatmul.bf16.gmra.mxu0 %v250
    %v261 = vpop.f32.mrf.mxu0
    %v262 = vadd.f32 %v236, %v261
    %v263 = vpop.f32.mrf.mxu0
    %v264 = vadd.f32 %v236, %v263
    %265 = vdwg.mxu0
    %v266 = vxor.u32 %v262, 2147483648
    %v267 = vxor.u32 %v264, 2147483648
    %v268 = vmul.f32 %v266, 1.442695
    %v269 = vpow.pop %v268
    %v270 = vmul.f32 %v267, 1.442695
    %v271 = vpow.pop %v270
    %v272 = vadd.f32 %v269, 1.0
    %v273 = vadd.f32 %v271, 1.0
    %v274 = vrcp.pop %v272
    %v275 = vmul.f32 %v272, %v274
    %v276 = vsub.f32 1.0, %v275
    %v277 = vmul.f32 %v274, %v276
    %v278 = vadd.f32 %v274, %v277
    %vm279 = vweird.f32 %v272
    %vm280 = vweird.f32 %v274
    %vm281 = vmor %vm279, %vm280
    %v282 = vsel %vm281, %v274, %v278
    %v283 = vand.u32 2147483647, %v272
    %vm284 = vcmp.eq.f32.partialorder %v283, 8.507059e+37
    %v285 = vand.u32 %v272, 2147483648
    %v286 = vor.u32 1.1754944e-38, %v285
    %v287 = vsel %vm284, %v286, %v282
    %v288 = vmul.f32 1.0, %v287
    %v289 = vrcp.pop %v273
    %v290 = vmul.f32 %v273, %v289
    %v291 = vsub.f32 1.0, %v290
    %v292 = vmul.f32 %v289, %v291
    %v293 = vadd.f32 %v289, %v292
    %vm294 = vweird.f32 %v273
    %vm295 = vweird.f32 %v289
    %vm296 = vmor %vm294, %vm295
    %v297 = vsel %vm296, %v289, %v293
    %v298 = vand.u32 2147483647, %v273
    %vm299 = vcmp.eq.f32.partialorder %v298, 8.507059e+37
    %v300 = vand.u32 %v273, 2147483648
    %v301 = vor.u32 1.1754944e-38, %v300
    %v302 = vsel %vm299, %v301, %v297
    %v303 = vmul.f32 1.0, %v302
    %v304 = vmul.f32 %v118, %v288
    %v305 = vmul.f32 %v119, %v303
    %v306 = vmul.f32 %v304, %v304
    %v307 = vmul.f32 %v305, %v305
    %v308 = vsel %vm138, %v306, 0.0
    %309 = vadd.xlane.f32.xlu0 %v308
    %v310 = vpop.xlane.xlu0 %309
    %v311 = vsel %vm138, %v307, 0.0
    %312 = vadd.xlane.f32.xlu0 %v311
    %v313 = vpop.xlane.xlu0 %312
    %v314 = vmax.f32 %v310, 1e-24
    %v315 = vmax.f32 %v313, 1e-24
    %v316 = vrsqrt.pop %v314
    %v317 = vmul.f32 %v316, %v314
    %v318 = vmul.f32 %v317, %v316
    %v319 = vmul.f32 0.5, %v318
    %v320 = vsub.f32 1.5, %v319
    %v321 = vmul.f32 %v316, %v320
    %vm322 = vweird.f32 %v314
    %vm323 = vweird.f32 %v316
    %vm324 = vmor %vm322, %vm323
    %v325 = vsel %vm324, %v316, %v321
    %v326 = vrsqrt.pop %v315
    %v327 = vmul.f32 %v326, %v315
    %v328 = vmul.f32 %v327, %v326
    %v329 = vmul.f32 0.5, %v328
    %v330 = vsub.f32 1.5, %v329
    %v331 = vmul.f32 %v326, %v330
    %vm332 = vweird.f32 %v315
    %vm333 = vweird.f32 %v326
    %vm334 = vmor %vm332, %vm333
    %v335 = vsel %vm334, %v326, %v331
    %v336 = vmul.f32 %v304, %v325
    %v337 = vmul.f32 %v305, %v335
    %v338 = vld [vmem:[#allocation8] sm:$0xff]
    %v339 = vld [vmem:[#allocation8 + $0x8] sm:$0xff]
    %v340 = vld [vmem:[#allocation8 + $0x10] sm:$0xff]
    %v341 = vld [vmem:[#allocation8 + $0x18] sm:$0xff]
    %v342 = vld [vmem:[#allocation8 + $0x20] sm:$0xff]
    %v343 = vld [vmem:[#allocation8 + $0x28] sm:$0xff]
    %v344 = vld [vmem:[#allocation8 + $0x30] sm:$0xff]
    %v345 = vld [vmem:[#allocation8 + $0x38] sm:$0xff]
    %v346 = vld [vmem:[#allocation8 + $0x40] sm:$0xff]
    %v347 = vld [vmem:[#allocation8 + $0x48] sm:$0xff]
    %v348 = vld [vmem:[#allocation8 + $0x50] sm:$0xff]
    %v349 = vld [vmem:[#allocation8 + $0x58] sm:$0xff]
    %v350 = vld [vmem:[#allocation8 + $0x60] sm:$0xff]
    %v351 = vld [vmem:[#allocation8 + $0x68] sm:$0xff]
    %v352 = vld [vmem:[#allocation8 + $0x70] sm:$0xff]
    %v353 = vld [vmem:[#allocation8 + $0x78] sm:$0xff]
    %v354 = vld [vmem:[#allocation8 + $0x80] sm:$0xff]
    %v355 = vld [vmem:[#allocation8 + $0x88] sm:$0xff]
    %v356 = vld [vmem:[#allocation8 + $0x90] sm:$0xff]
    %v357 = vld [vmem:[#allocation8 + $0x98] sm:$0xff]
    %v359 = vsel %vm138, %v336, 0
    %v362 = vsel %vm138, %v337, 0
    %364 = vmatpush.msra.mxu0 0.0
    %365 = vmatpush.msra.mxu0 0.0
    %366 = vmatpush.msra.mxu0 0.0
    %367 = vmatpush.msra.mxu0 0.0
    %368 = vmatpush.msra.mxu0 0.0
    %369 = vmatpush.msra.mxu0 0.0
    %370 = vmatpush.msra.mxu0 0.0
    %371 = vmatpush.msra.mxu0 0.0
    %372 = vmatpush.msra.mxu0 0.0
    %373 = vmatpush.msra.mxu0 0.0
    %374 = vmatpush.msra.mxu0 0.0
    %375 = vmatpush.msra.mxu0 0.0
    %376 = vmatpush.msra.mxu0 %v353
    %377 = vmatpush.msra.mxu0 %v348
    %378 = vmatpush.msra.mxu0 %v343
    %379 = vmatpush.msra.mxu0 %v338
    %380 = vmatmul.f32.gmra.mxu0 %v359
    %v381 = vpop.f32.mrf.mxu0
    %v382 = vadd.f32 0.0, %v381
    %383 = vmatmul.f32.gmra.mxu0 %v362
    %v384 = vpop.f32.mrf.mxu0
    %v385 = vadd.f32 0.0, %v384
    %386 = vdwg.mxu0
    %387 = vmatpush.msra.mxu0 0.0
    %388 = vmatpush.msra.mxu0 0.0
    %389 = vmatpush.msra.mxu0 0.0
    %390 = vmatpush.msra.mxu0 0.0
    %391 = vmatpush.msra.mxu0 0.0
    %392 = vmatpush.msra.mxu0 0.0
    %393 = vmatpush.msra.mxu0 0.0
    %394 = vmatpush.msra.mxu0 0.0
    %395 = vmatpush.msra.mxu0 0.0
    %396 = vmatpush.msra.mxu0 0.0
    %397 = vmatpush.msra.mxu0 0.0
    %398 = vmatpush.msra.mxu0 0.0
    %399 = vmatpush.msra.mxu0 %v354
    %400 = vmatpush.msra.mxu0 %v349
    %401 = vmatpush.msra.mxu0 %v344
    %402 = vmatpush.msra.mxu0 %v339
    %403 = vmatmul.f32.gmra.mxu0 %v359
    %v404 = vpop.f32.mrf.mxu0
    %v405 = vadd.f32 0.0, %v404
    %406 = vmatmul.f32.gmra.mxu0 %v362
    %v407 = vpop.f32.mrf.mxu0
    %v408 = vadd.f32 0.0, %v407
    %409 = vdwg.mxu0
    %410 = vmatpush.msra.mxu0 0.0
    %411 = vmatpush.msra.mxu0 0.0
    %412 = vmatpush.msra.mxu0 0.0
    %413 = vmatpush.msra.mxu0 0.0
    %414 = vmatpush.msra.mxu0 0.0
    %415 = vmatpush.msra.mxu0 0.0
    %416 = vmatpush.msra.mxu0 0.0
    %417 = vmatpush.msra.mxu0 0.0
    %418 = vmatpush.msra.mxu0 0.0
    %419 = vmatpush.msra.mxu0 0.0
    %420 = vmatpush.msra.mxu0 0.0
    %421 = vmatpush.msra.mxu0 0.0
    %422 = vmatpush.msra.mxu0 %v355
    %423 = vmatpush.msra.mxu0 %v350
    %424 = vmatpush.msra.mxu0 %v345
    %425 = vmatpush.msra.mxu0 %v340
    %426 = vmatmul.f32.gmra.mxu0 %v359
    %v427 = vpop.f32.mrf.mxu0
    %v428 = vadd.f32 0.0, %v427
    %429 = vmatmul.f32.gmra.mxu0 %v362
    %v430 = vpop.f32.mrf.mxu0
    %v431 = vadd.f32 0.0, %v430
    %432 = vdwg.mxu0
    %433 = vmatpush.msra.mxu0 0.0
    %434 = vmatpush.msra.mxu0 0.0
    %435 = vmatpush.msra.mxu0 0.0
    %436 = vmatpush.msra.mxu0 0.0
    %437 = vmatpush.msra.mxu0 0.0
    %438 = vmatpush.msra.mxu0 0.0
    %439 = vmatpush.msra.mxu0 0.0
    %440 = vmatpush.msra.mxu0 0.0
    %441 = vmatpush.msra.mxu0 0.0
    %442 = vmatpush.msra.mxu0 0.0
    %443 = vmatpush.msra.mxu0 0.0
    %444 = vmatpush.msra.mxu0 0.0
    %445 = vmatpush.msra.mxu0 %v356
    %446 = vmatpush.msra.mxu0 %v351
    %447 = vmatpush.msra.mxu0 %v346
    %448 = vmatpush.msra.mxu0 %v341
    %449 = vmatmul.f32.gmra.mxu0 %v359
    %v450 = vpop.f32.mrf.mxu0
    %v451 = vadd.f32 0.0, %v450
    %452 = vmatmul.f32.gmra.mxu0 %v362
    %v453 = vpop.f32.mrf.mxu0
    %v454 = vadd.f32 0.0, %v453
    %455 = vdwg.mxu0
    %456 = vmatpush.msra.mxu0 0.0
    %457 = vmatpush.msra.mxu0 0.0
    %458 = vmatpush.msra.mxu0 0.0
    %459 = vmatpush.msra.mxu0 0.0
    %460 = vmatpush.msra.mxu0 0.0
    %461 = vmatpush.msra.mxu0 0.0
    %462 = vmatpush.msra.mxu0 0.0
    %463 = vmatpush.msra.mxu0 0.0
    %464 = vmatpush.msra.mxu0 0.0
    %465 = vmatpush.msra.mxu0 0.0
    %466 = vmatpush.msra.mxu0 0.0
    %467 = vmatpush.msra.mxu0 0.0
    %468 = vmatpush.msra.mxu0 %v357
    %469 = vmatpush.msra.mxu0 %v352
    %470 = vmatpush.msra.mxu0 %v347
    %471 = vmatpush.msra.mxu0 %v342
    %472 = vmatmul.f32.gmra.mxu0 %v359
    %v473 = vpop.f32.mrf.mxu0
    %v474 = vadd.f32 0.0, %v473
    %475 = vmatmul.f32.gmra.mxu0 %v362
    %v476 = vpop.f32.mrf.mxu0
    %v477 = vadd.f32 0.0, %v476
    %478 = vdwg.mxu0
    %v479 = vmax.f32 %v382, %v405
    %v480 = vmax.f32 %v385, %v408
    %v481 = vmax.f32 %v479, %v428
    %v482 = vmax.f32 %v480, %v431
    %v483 = vmax.f32 %v481, %v451
    %v484 = vmax.f32 %v482, %v454
    %v485 = vmax.f32 %v483, %v474
    %v486 = vmax.f32 %v484, %v477
    %v487 = vpack.c.bf16 %v486, %v485
    %v488 = vld [vmem:[#allocation10] sm:$0xf]
    %v489 = vld [vmem:[#allocation10 + $0x4] sm:$0xf]
    %v490 = vld [vmem:[#allocation10 + $0x8] sm:$0xf]
    %v491 = vld [vmem:[#allocation10 + $0xc] sm:$0xf]
    %v492 = vld [vmem:[#allocation10 + $0x10] sm:$0xf]
    %v493 = vld [vmem:[#allocation10 + $0x14] sm:$0xf]
    %v494 = vld [vmem:[#allocation10 + $0x18] sm:$0xf]
    %v495 = vld [vmem:[#allocation10 + $0x1c] sm:$0xf]
    %v496 = vld [vmem:[#allocation10 + $0x20] sm:$0xf]
    %v497 = vld [vmem:[#allocation10 + $0x24] sm:$0xf]
    %v498 = vld [vmem:[#allocation10 + $0x28] sm:$0xf]
    %v499 = vld [vmem:[#allocation10 + $0x2c] sm:$0xf]
    %v500 = vld [vmem:[#allocation10 + $0x30] sm:$0xf]
    %v501 = vld [vmem:[#allocation10 + $0x34] sm:$0xf]
    %v502 = vld [vmem:[#allocation10 + $0x38] sm:$0xf]
    %v503 = vld [vmem:[#allocation10 + $0x3c] sm:$0xf]
    %v504 = vperm.slane %v117, 4
    %v521 = vunpack.c.l.b16 %v488
    %v522 = vunpack.c.l.b16 %v489
    %v523 = vunpack.c.l.b16 %v490
    %v524 = vunpack.c.l.b16 %v491
    %v525 = vunpack.c.l.b16 %v492
    %v526 = vunpack.c.l.b16 %v493
    %v527 = vunpack.c.l.b16 %v494
    %v528 = vunpack.c.l.b16 %v495
    %v529 = vunpack.c.l.b16 %v496
    %v530 = vunpack.c.l.b16 %v497
    %v531 = vunpack.c.l.b16 %v498
    %v532 = vunpack.c.l.b16 %v499
    %v533 = vunpack.c.l.b16 %v500
    %v534 = vunpack.c.l.b16 %v501
    %v535 = vunpack.c.l.b16 %v502
    %v536 = vunpack.c.l.b16 %v503
    %v537 = vpack.c.b16 %v522, %v521
    %v538 = vpack.c.b16 %v524, %v523
    %v539 = vpack.c.b16 %v526, %v525
    %v540 = vpack.c.b16 %v528, %v527
    %v541 = vpack.c.b16 %v530, %v529
    %v542 = vpack.c.b16 %v532, %v531
    %v543 = vpack.c.b16 %v534, %v533
    %v544 = vpack.c.b16 %v536, %v535
    %553 = vmatpush.bf16.msra.mxu0 %v544
    %554 = vmatpush.bf16.msra.mxu0 %v543
    %555 = vmatpush.bf16.msra.mxu0 %v542
    %556 = vmatpush.bf16.msra.mxu0 %v541
    %557 = vmatpush.bf16.msra.mxu0 %v540
    %558 = vmatpush.bf16.msra.mxu0 %v539
    %559 = vmatpush.bf16.msra.mxu0 %v538
    %560 = vmatpush.bf16.msra.mxu0 %v537
    %561 = vmatmul.bf16.gmra.mxu0 %v487
    %v562 = vpop.f32.mrf.mxu0
    %v563 = vadd.f32 %v504, %v562
    %v564 = vpop.f32.mrf.mxu0
    %v565 = vadd.f32 %v504, %v564
    %566 = vdwg.mxu0
    %v567 = vpack.c.bf16 %v563, %v563
    %v568 = vpack.c.bf16 %v565, %v565
    %569 = vst [vmem:[#allocation13] sm:$0xf] %v567
    %570 = vst [vmem:[#allocation13 + $0x4] sm:$0xf] %v568
    // Predicated region
    $region50: #{tpu_custom_call.1} parent=1 // pred_check
      _
    $region51: #{tpu_custom_call.1} parent=1 // pred_check_branch
      %572 = sbr.rel (0) target = $region53
    $region52: #{tpu_custom_call.1} parent=1 // pred_region
      %574 = vsyncadd [#allocation4], 0
      %s575 = sshll.u32 [#allocation13], 4
      %s576 = int_to_ptr.vmem [resolvable:$true] %s575
      %s577 = sshll.u32 %s6, 4
      %s578 = int_to_ptr.hbm [resolvable:$true] %s577
      %583 = dma.vmem_to_hbm [thread:$0]  %s576, 128, %s578, [#allocation4], 64, 64, 4
    $region53: #{tpu_custom_call.1} parent=1 // pred_fallthru
      _
    // Predicated region
    $region54: #{tpu_custom_call.1} parent=1 // pred_check
      _
    $region55: #{tpu_custom_call.1} parent=1 // pred_check_branch
      %585 = sbr.rel (0) target = $region57
    $region56: #{tpu_custom_call.1} parent=1 // pred_region
      %587 = dma.done [#allocation4], 128
    $region57: #{tpu_custom_call.1} parent=1 // pred_fallthru
      _
    %588 = vsyncpa [#allocation3], 1
    %589 = vsyncpa [#allocation6], 1
    %590 = vsyncpa [#allocation9], 1
    %591 = vsyncpa [#allocation12], 1
    %592 = vsyncpa [#allocation4], 1

</llo_original>
